<compile_context>
chip_gen: v7x
topology: tpu7x:2x2x1
jax: 0.10.0
libtpu: 0.0.40
codegen_flags: <defaults>
</compile_context>

<pallas_src>
import functools

import jax
import jax.numpy as jnp
from jax.experimental import pallas as pl
from jax.experimental.pallas import tpu as pltpu

EPS = 1e-5


def _round_up(n, m):
    return ((n + m - 1) // m) * m


def _pad2(a, rows, cols):
    return jnp.pad(a, ((0, rows - a.shape[0]), (0, cols - a.shape[1])))


def _layernorm_masked(v, gamma, beta, d_real):
    # PyTorch LayerNorm (biased variance, eps inside rsqrt) over the first d_real lanes.
    # Padded lanes are zero, so sums over the full (padded) lane axis divided by d_real
    # reproduce the exact unpadded statistics; gamma/beta are zero-padded so padded
    # output lanes stay zero.
    s = jnp.sum(v, axis=-1, keepdims=True)
    ss = jnp.sum(v * v, axis=-1, keepdims=True)
    mu = s / d_real
    var = ss / d_real - mu * mu
    return (v - mu) * jax.lax.rsqrt(var + EPS) * gamma + beta


# ---------------------------------------------------------------------------
# Kernel A: batch-invariant random-synthesizer path (runs exactly once).
# ---------------------------------------------------------------------------
def synth_kernel(x0_ref, attn_ref, wv_ref, bv_ref, att0_ref):
    # softmax(attention, dim=-1) in f32 (one-shot, exact reciprocal is fine).
    a = attn_ref[...]                                   # (S, S)
    a = a - jnp.max(a, axis=-1, keepdims=True)
    e = jnp.exp(a)
    p = e / jnp.sum(e, axis=-1, keepdims=True)

    # value_fc on batch 0 (Wv pre-transposed to [in, out] and lane-padded), then P @ value.
    value0 = jnp.dot(x0_ref[...], wv_ref[...],
                     preferred_element_type=jnp.float32) + bv_ref[...]
    att0_ref[...] = jnp.dot(p, value0, preferred_element_type=jnp.float32)
# TODO(synk): at large S, tile the (S,S) softmax + matmul over row blocks with a grid
# so the full attention matrix never has to be resident in VMEM at once.


# ---------------------------------------------------------------------------
# Kernel B: residual + LayerNorm + hidden-blocked FFN + LayerNorm (hot path).
# grid = (B, S/tS, H/tH); the H axis is a reduction into acc_ref.
# ---------------------------------------------------------------------------
def block_kernel(x_ref, att_ref, g_ref, b_ref, w1_ref, b1_ref, w2_ref, b2_ref,
                 out_ref, y_ref, acc_ref, *, d_real):
    h = pl.program_id(2)

    @pl.when(h == 0)
    def _():
        # y = dropout(norm(attention_out + x)); dropout is identity in eval mode.
        y_ref[...] = _layernorm_masked(x_ref[...] + att_ref[...],
                                       g_ref[...], b_ref[...], d_real)
        acc_ref[...] = jnp.zeros_like(acc_ref)

    # One hidden-dim chunk of the FFN: relu(y @ W1[:, hk] + b1[hk]) @ W2[hk, :]
    # bf16 MXU matmuls with f32 accumulation; elementwise stays f32.
    hid = jnp.dot(y_ref[...].astype(jnp.bfloat16), w1_ref[...],
                  preferred_element_type=jnp.float32) + b1_ref[...]
    hid = jnp.maximum(hid, 0.0)
    acc_ref[...] += jnp.dot(hid.astype(jnp.bfloat16), w2_ref[...],
                            preferred_element_type=jnp.float32)

    @pl.when(h == pl.num_programs(2) - 1)
    def _():
        ff = acc_ref[...] + b2_ref[...]
        out_ref[...] = _layernorm_masked(ff + y_ref[...],
                                         g_ref[...], b_ref[...], d_real)


def _vmem_budget_bytes():
    # Generation-aware VMEM budget: 64 MiB physical on v7x, 128 MiB on v5e/v6e.
    try:
        cap = int(pltpu.get_tpu_info().vmem_capacity_bytes)
    except Exception:
        cap = 64 << 20          # conservative fallback (v7x)
    return (cap * 3) // 4       # leave headroom for Mosaic internals


def _pick_chunk(total, cap, quantum):
    # Largest multiple of `quantum` <= cap that divides `total` (total % quantum == 0).
    best = quantum
    t = quantum
    while t <= min(cap, total):
        if total % t == 0:
            best = t
        t += quantum
    return best


def transformer_block(x, params):
    """x: (B, S, D) float32. params: dict of weights. Returns (B, S, D) float32."""
    B, S, D = x.shape
    H = params["w1"].shape[0]
    Dp = _round_up(D, 128)
    Hp = _round_up(H, 128)

    budget = _vmem_budget_bytes()

    # Sequence tile: ~10 f32 (tS, Dp) buffers live (double-buffered x/att/out + scratch).
    cap_rows = max(8, (budget // 2) // (Dp * 4 * 10))
    tS = min(_round_up(S, 8), (cap_rows // 8) * 8, 1024)
    S_p = _round_up(S, tS)                    # pad rows -> exact grid, no giant fallback tile
    tH = _pick_chunk(Hp, 512, 128)            # FFN hidden-dim chunk

    # ---- weight prep: pre-transpose to [in, out], zero-pad to lane multiples ----
    wv_t = _pad2(params["wv"].T, Dp, Dp)                        # f32 (one-shot path)
    bv = _pad2(params["bv"].reshape(1, D), 1, Dp)
    gamma = _pad2(params["gamma"].reshape(1, D), 1, Dp)
    beta = _pad2(params["beta"].reshape(1, D), 1, Dp)
    w1_t = _pad2(params["w1"].T, Dp, Hp).astype(jnp.bfloat16)   # (Dp, Hp)
    b1 = _pad2(params["b1"].reshape(1, H), 1, Hp)
    w2_t = _pad2(params["w2"].T, Hp, Dp).astype(jnp.bfloat16)   # (Hp, Dp)
    b2 = _pad2(params["b2"].reshape(1, D), 1, Dp)

    x0_p = _pad2(x[0], S, Dp)                                   # batch-0 rows, padded lanes
    attn = params["attention"][0]                               # (S, S)

    # --- Kernel A: batch-invariant synthesizer output (hoisted out of the grid). ---
    att0 = pl.pallas_call(
        synth_kernel,
        out_shape=jax.ShapeDtypeStruct((S, Dp), jnp.float32),
    )(x0_p, attn, wv_t, bv)

    # --- Kernel B: hot path. ---
    x_p = jnp.pad(x, ((0, 0), (0, S_p - S), (0, Dp - D)))
    att0_p = jnp.pad(att0, ((0, S_p - S), (0, 0)))

    row_spec = pl.BlockSpec((None, tS, Dp), lambda b, s, h: (b, s, 0))
    const_d = lambda b, s, h: (0, 0)

    kernel = functools.partial(block_kernel, d_real=float(D))

    out_p = pl.pallas_call(
        kernel,
        out_shape=jax.ShapeDtypeStruct((B, S_p, Dp), jnp.float32),
        grid_spec=pltpu.PrefetchScalarGridSpec(
            num_scalar_prefetch=0,
            grid=(B, S_p // tS, Hp // tH),
            in_specs=[
                row_spec,                                         # x rows
                pl.BlockSpec((tS, Dp), lambda b, s, h: (s, 0)),   # att0: batch-broadcast via index_map
                pl.BlockSpec((1, Dp), const_d),                   # gamma
                pl.BlockSpec((1, Dp), const_d),                   # beta
                pl.BlockSpec((Dp, tH), lambda b, s, h: (0, h)),   # W1^T chunk (bf16)
                pl.BlockSpec((1, tH), lambda b, s, h: (0, h)),    # b1 chunk
                pl.BlockSpec((tH, Dp), lambda b, s, h: (h, 0)),   # W2^T chunk (bf16)
                pl.BlockSpec((1, Dp), const_d),                   # b2
            ],
            out_specs=row_spec,
            scratch_shapes=[pltpu.VMEM((tS, Dp), jnp.float32),    # y (first LayerNorm output)
                            pltpu.VMEM((tS, Dp), jnp.float32)],   # FFN accumulator
        ),
        compiler_params=pltpu.CompilerParams(
            dimension_semantics=("parallel", "parallel", "arbitrary"),
            vmem_limit_bytes=budget,
        ),
    )(x_p, att0_p, gamma, beta, w1_t, b1, w2_t, b2)

    # TODO(synk): at production dims, single-buffer the constant-index operands
    # (pipeline_mode=pl.Buffered(1) on gamma/beta/b1/b2 and the weight chunks) to halve
    # their VMEM residency; negligible at these toy/padded sizes so left at the default.
    return out_p[:, :S, :D]


def init_params(key, S, D, hidden_dim_factor):
    H = D * hidden_dim_factor
    ks = jax.random.split(key, 8)

    def linear_init(kw, kb, out_dim, in_dim):
        bound = 1.0 / jnp.sqrt(in_dim)
        w = jax.random.uniform(kw, (out_dim, in_dim), jnp.float32, -bound, bound)
        b = jax.random.uniform(kb, (out_dim,), jnp.float32, -bound, bound)
        return w, b

    # xavier_uniform for the (1, S, S) attention parameter.
    xav = jnp.sqrt(6.0 / (S + S))
    attention = jax.random.uniform(ks[0], (1, S, S), jnp.float32, -xav, xav)
    wv, bv = linear_init(ks[1], ks[2], D, D)
    w1, b1 = linear_init(ks[3], ks[4], H, D)
    w2, b2 = linear_init(ks[5], ks[6], D, H)
    return {
        "attention": attention,
        "wv": wv, "bv": bv,
        "gamma": jnp.ones((D,), jnp.float32),
        "beta": jnp.zeros((D,), jnp.float32),
        "w1": w1, "b1": b1,
        "w2": w2, "b2": b2,
    }


def reference_forward(x, p):
    """Pure-JAX reference mirroring the PyTorch forward (eval mode) at matched
    matmul precision (bf16 inputs, f32 accumulation for the feed-forward)."""
    value0 = x[0] @ p["wv"].T + p["bv"]                  # (S, D)
    sm = jax.nn.softmax(p["attention"][0], axis=-1)      # (S, S)
    att0 = sm @ value0                                   # (S, D)  ([0] indexing quirk)

    def ln(v):
        mu = v.mean(-1, keepdims=True)
        var = ((v - mu) ** 2).mean(-1, keepdims=True)
        return (v - mu) * jax.lax.rsqrt(var + EPS) * p["gamma"] + p["beta"]

    y = ln(att0[None, :, :] + x)                         # (B, S, D)
    w1t = p["w1"].T.astype(jnp.bfloat16)
    w2t = p["w2"].T.astype(jnp.bfloat16)
    h = jnp.dot(y.astype(jnp.bfloat16), w1t, preferred_element_type=jnp.float32) + p["b1"]
    h = jnp.maximum(h, 0.0)
    ff = jnp.dot(h.astype(jnp.bfloat16), w2t, preferred_element_type=jnp.float32) + p["b2"]
    return ln(ff + y)


if __name__ == "__main__":
    B, S, D, HF = 2, 8, 32, 4
    key = jax.random.PRNGKey(0)
    kx, kp = jax.random.split(key)
    x = jax.random.normal(kx, (B, S, D), jnp.float32)
    params = init_params(kp, S, D, HF)

    run = jax.jit(transformer_block)
    out = jax.block_until_ready(run(x, params))

    ref = reference_forward(x, params)
    assert out.shape == (B, S, D)
    max_err = float(jnp.max(jnp.abs(out - ref)))
    assert jnp.allclose(out, ref, atol=1e-2, rtol=1e-2), max_err

    print("KERNEL_OK")
</pallas_src>

<mosaic_0001>
module attributes {stable_mosaic.version = 11 : i64} {
  func.func @synth_kernel(%arg0: memref<8x128xf32, #tpu.memory_space<vmem>>, %arg1: memref<8x8xf32, #tpu.memory_space<vmem>>, %arg2: memref<128x128xf32, #tpu.memory_space<vmem>>, %arg3: memref<1x128xf32, #tpu.memory_space<vmem>>, %arg4: memref<8x128xf32, #tpu.memory_space<vmem>>) attributes {dimension_semantics = [], scalar_prefetch = 0 : i64, scratch_operands = 0 : i64, tpu.core_type = #tpu.core_type<tc>} {
    %c0 = arith.constant 0 : index
    %c0_0 = arith.constant 0 : index
    %0 = vector.load %arg1[%c0, %c0_0] : memref<8x8xf32, #tpu.memory_space<vmem>>, vector<8x8xf32>
    %cst = arith.constant dense<0xFF800000> : vector<8xf32>
    %1 = vector.multi_reduction <maximumf>, %0, %cst [1] : vector<8x8xf32> to vector<8xf32>
    %2 = vector.shape_cast %1 : vector<8xf32> to vector<8x1xf32>
    %3 = vector.broadcast %2 : vector<8x1xf32> to vector<8x8xf32>
    %4 = arith.subf %0, %3 : vector<8x8xf32>
    %5 = math.exp %4 : vector<8x8xf32>
    %cst_1 = arith.constant dense<0.000000e+00> : vector<8xf32>
    %6 = vector.multi_reduction <add>, %5, %cst_1 [1] : vector<8x8xf32> to vector<8xf32>
    %7 = vector.shape_cast %6 : vector<8xf32> to vector<8x1xf32>
    %8 = vector.broadcast %7 : vector<8x1xf32> to vector<8x8xf32>
    %9 = arith.divf %5, %8 : vector<8x8xf32>
    %c0_2 = arith.constant 0 : index
    %c0_3 = arith.constant 0 : index
    %10 = vector.load %arg0[%c0_2, %c0_3] : memref<8x128xf32, #tpu.memory_space<vmem>>, vector<8x128xf32>
    %c0_4 = arith.constant 0 : index
    %c0_5 = arith.constant 0 : index
    %11 = vector.load %arg2[%c0_4, %c0_5] : memref<128x128xf32, #tpu.memory_space<vmem>>, vector<128x128xf32>
    %cst_6 = arith.constant dense<0.000000e+00> : vector<8x128xf32>
    %12 = tpu.matmul %10, %11, %cst_6 {dimension_numbers = #tpu.dot_dimension_numbers<[1], [0], [0], [1], [0, 0, 1, 1], [], []>} : vector<8x128xf32>, vector<128x128xf32>, vector<8x128xf32> -> vector<8x128xf32>
    %c0_7 = arith.constant 0 : index
    %c0_8 = arith.constant 0 : index
    %13 = vector.load %arg3[%c0_7, %c0_8] : memref<1x128xf32, #tpu.memory_space<vmem>>, vector<1x128xf32>
    %14 = vector.broadcast %13 : vector<1x128xf32> to vector<8x128xf32>
    %15 = arith.addf %12, %14 : vector<8x128xf32>
    %cst_9 = arith.constant dense<0.000000e+00> : vector<8x128xf32>
    %16 = tpu.matmul %9, %15, %cst_9 {dimension_numbers = #tpu.dot_dimension_numbers<[1], [0], [0], [1], [0, 0, 1, 1], [], []>} : vector<8x8xf32>, vector<8x128xf32>, vector<8x128xf32> -> vector<8x128xf32>
    %c0_10 = arith.constant 0 : index
    %c0_11 = arith.constant 0 : index
    %17 = vector.load %arg4[%c0_10, %c0_11] : memref<8x128xf32, #tpu.memory_space<vmem>>, vector<8x128xf32>
    tpu.vector_store %arg4[%c0_10, %c0_11], %16 {strides = array<i32>} : memref<8x128xf32, #tpu.memory_space<vmem>>, vector<8x128xf32>,
    return
  }
}

module attributes {stable_mosaic.version = 11 : i64} {
  func.func @block_kernel(%arg0: i32, %arg1: i32, %arg2: i32, %arg3: memref<1x8x128xf32, #tpu.memory_space<vmem>>, %arg4: memref<8x128xf32, #tpu.memory_space<vmem>>, %arg5: memref<1x128xf32, #tpu.memory_space<vmem>>, %arg6: memref<1x128xf32, #tpu.memory_space<vmem>>, %arg7: memref<128x128xbf16, #tpu.memory_space<vmem>>, %arg8: memref<1x128xf32, #tpu.memory_space<vmem>>, %arg9: memref<128x128xbf16, #tpu.memory_space<vmem>>, %arg10: memref<1x128xf32, #tpu.memory_space<vmem>>, %arg11: memref<1x8x128xf32, #tpu.memory_space<vmem>>, %arg12: memref<8x128xf32, #tpu.memory_space<vmem>>, %arg13: memref<8x128xf32, #tpu.memory_space<vmem>>) attributes {dimension_semantics = [#tpu.dimension_semantics<parallel>, #tpu.dimension_semantics<parallel>, #tpu.dimension_semantics<arbitrary>], iteration_bounds = array<i64: 2, 1, 1>, scalar_prefetch = 0 : i64, scratch_operands = 2 : i64, tpu.core_type = #tpu.core_type<tc>, window_params = [{transform_indices = @transform_0, window_bounds = array<i64: 1, 8, 128>}, {transform_indices = @transform_1, window_bounds = array<i64: 8, 128>}, {pipeline_mode = #tpu.pipeline_mode<synchronous>, transform_indices = @transform_2, window_bounds = array<i64: 1, 128>}, {pipeline_mode = #tpu.pipeline_mode<synchronous>, transform_indices = @transform_3, window_bounds = array<i64: 1, 128>}, {transform_indices = @transform_4, window_bounds = array<i64: 128, 128>}, {transform_indices = @transform_5, window_bounds = array<i64: 1, 128>}, {transform_indices = @transform_6, window_bounds = array<i64: 128, 128>}, {pipeline_mode = #tpu.pipeline_mode<synchronous>, transform_indices = @transform_7, window_bounds = array<i64: 1, 128>}, {transform_indices = @transform_8, window_bounds = array<i64: 1, 8, 128>}]} {
    %c0_i32 = arith.constant 0 : i32
    %0 = arith.cmpi eq, %arg2, %c0_i32 : i32
    %1 = arith.extui %0 : i1 to i32
    %c0_i32_0 = arith.constant 0 : i32
    %2 = arith.cmpi ne, %1, %c0_i32_0 : i32
    scf.if %2 {
      %c0_16 = arith.constant 0 : index
      %c0_17 = arith.constant 0 : index
      %c0_18 = arith.constant 0 : index
      %21 = vector.load %arg3[%c0_16, %c0_17, %c0_18] : memref<1x8x128xf32, #tpu.memory_space<vmem>>, vector<1x8x128xf32>
      %22 = vector.shape_cast %21 : vector<1x8x128xf32> to vector<8x128xf32>
      %c0_19 = arith.constant 0 : index
      %c0_20 = arith.constant 0 : index
      %23 = vector.load %arg4[%c0_19, %c0_20] : memref<8x128xf32, #tpu.memory_space<vmem>>, vector<8x128xf32>
      %24 = arith.addf %22, %23 : vector<8x128xf32>
      %c0_21 = arith.constant 0 : index
      %c0_22 = arith.constant 0 : index
      %25 = vector.load %arg5[%c0_21, %c0_22] : memref<1x128xf32, #tpu.memory_space<vmem>>, vector<1x128xf32>
      %c0_23 = arith.constant 0 : index
      %c0_24 = arith.constant 0 : index
      %26 = vector.load %arg6[%c0_23, %c0_24] : memref<1x128xf32, #tpu.memory_space<vmem>>, vector<1x128xf32>
      %cst_25 = arith.constant dense<0.000000e+00> : vector<8xf32>
      %27 = vector.multi_reduction <add>, %24, %cst_25 [1] : vector<8x128xf32> to vector<8xf32>
      %28 = vector.shape_cast %27 : vector<8xf32> to vector<8x1xf32>
      %29 = arith.mulf %24, %24 : vector<8x128xf32>
      %cst_26 = arith.constant dense<0.000000e+00> : vector<8xf32>
      %30 = vector.multi_reduction <add>, %29, %cst_26 [1] : vector<8x128xf32> to vector<8xf32>
      %31 = vector.shape_cast %30 : vector<8xf32> to vector<8x1xf32>
      %cst_27 = arith.constant 3.200000e+01 : f32
      %32 = vector.broadcast %cst_27 : f32 to vector<8x1xf32>
      %33 = arith.divf %28, %32 : vector<8x1xf32>
      %cst_28 = arith.constant 3.200000e+01 : f32
      %34 = vector.broadcast %cst_28 : f32 to vector<8x1xf32>
      %35 = arith.divf %31, %34 : vector<8x1xf32>
      %36 = arith.mulf %33, %33 : vector<8x1xf32>
      %37 = arith.subf %35, %36 : vector<8x1xf32>
      %38 = vector.broadcast %33 : vector<8x1xf32> to vector<8x128xf32>
      %39 = arith.subf %24, %38 : vector<8x128xf32>
      %cst_29 = arith.constant 9.99999974E-6 : f32
      %40 = vector.broadcast %cst_29 : f32 to vector<8x1xf32>
      %41 = arith.addf %37, %40 : vector<8x1xf32>
      %42 = math.rsqrt %41 : vector<8x1xf32>
      %43 = vector.broadcast %42 : vector<8x1xf32> to vector<8x128xf32>
      %44 = arith.mulf %39, %43 : vector<8x128xf32>
      %45 = vector.broadcast %25 : vector<1x128xf32> to vector<8x128xf32>
      %46 = arith.mulf %44, %45 : vector<8x128xf32>
      %47 = vector.broadcast %26 : vector<1x128xf32> to vector<8x128xf32>
      %48 = arith.addf %46, %47 : vector<8x128xf32>
      %c0_30 = arith.constant 0 : index
      %c0_31 = arith.constant 0 : index
      %49 = vector.load %arg12[%c0_30, %c0_31] : memref<8x128xf32, #tpu.memory_space<vmem>>, vector<8x128xf32>
      tpu.vector_store %arg12[%c0_30, %c0_31], %48 {strides = array<i32>} : memref<8x128xf32, #tpu.memory_space<vmem>>, vector<8x128xf32>,
      %cst_32 = arith.constant 0.000000e+00 : f32
      %50 = vector.broadcast %cst_32 : f32 to vector<8x128xf32>
      %c0_33 = arith.constant 0 : index
      %c0_34 = arith.constant 0 : index
      %51 = vector.load %arg13[%c0_33, %c0_34] : memref<8x128xf32, #tpu.memory_space<vmem>>, vector<8x128xf32>
      tpu.vector_store %arg13[%c0_33, %c0_34], %50 {strides = array<i32>} : memref<8x128xf32, #tpu.memory_space<vmem>>, vector<8x128xf32>,
    } else {
    }
    %c0 = arith.constant 0 : index
    %c0_1 = arith.constant 0 : index
    %3 = vector.load %arg12[%c0, %c0_1] : memref<8x128xf32, #tpu.memory_space<vmem>>, vector<8x128xf32>
    %4 = arith.truncf %3 : vector<8x128xf32> to vector<8x128xbf16>
    %c0_2 = arith.constant 0 : index
    %c0_3 = arith.constant 0 : index
    %5 = vector.load %arg7[%c0_2, %c0_3] : memref<128x128xbf16, #tpu.memory_space<vmem>>, vector<128x128xbf16>
    %cst = arith.constant dense<0.000000e+00> : vector<8x128xf32>
    %6 = tpu.matmul %4, %5, %cst {dimension_numbers = #tpu.dot_dimension_numbers<[1], [0], [0], [1], [0, 0, 1, 1], [], []>} : vector<8x128xbf16>, vector<128x128xbf16>, vector<8x128xf32> -> vector<8x128xf32>
    %c0_4 = arith.constant 0 : index
    %c0_5 = arith.constant 0 : index
    %7 = vector.load %arg8[%c0_4, %c0_5] : memref<1x128xf32, #tpu.memory_space<vmem>>, vector<1x128xf32>
    %8 = vector.broadcast %7 : vector<1x128xf32> to vector<8x128xf32>
    %9 = arith.addf %6, %8 : vector<8x128xf32>
    %cst_6 = arith.constant 0.000000e+00 : f32
    %10 = vector.broadcast %cst_6 : f32 to vector<8x128xf32>
    %11 = arith.maximumf %9, %10 : vector<8x128xf32>
    %c0_7 = arith.constant 0 : index
    %c0_8 = arith.constant 0 : index
    %12 = vector.load %arg13[%c0_7, %c0_8] : memref<8x128xf32, #tpu.memory_space<vmem>>, vector<8x128xf32>
    %13 = arith.truncf %11 : vector<8x128xf32> to vector<8x128xbf16>
    %c0_9 = arith.constant 0 : index
    %c0_10 = arith.constant 0 : index
    %14 = vector.load %arg9[%c0_9, %c0_10] : memref<128x128xbf16, #tpu.memory_space<vmem>>, vector<128x128xbf16>
    %cst_11 = arith.constant dense<0.000000e+00> : vector<8x128xf32>
    %15 = tpu.matmul %13, %14, %cst_11 {dimension_numbers = #tpu.dot_dimension_numbers<[1], [0], [0], [1], [0, 0, 1, 1], [], []>} : vector<8x128xbf16>, vector<128x128xbf16>, vector<8x128xf32> -> vector<8x128xf32>
    %16 = arith.addf %12, %15 : vector<8x128xf32>
    %c0_12 = arith.constant 0 : index
    %c0_13 = arith.constant 0 : index
    %17 = vector.load %arg13[%c0_12, %c0_13] : memref<8x128xf32, #tpu.memory_space<vmem>>, vector<8x128xf32>
    tpu.vector_store %arg13[%c0_12, %c0_13], %16 {strides = array<i32>} : memref<8x128xf32, #tpu.memory_space<vmem>>, vector<8x128xf32>,
    %c0_i32_14 = arith.constant 0 : i32
    %18 = arith.cmpi eq, %arg2, %c0_i32_14 : i32
    %19 = arith.extui %18 : i1 to i32
    %c0_i32_15 = arith.constant 0 : i32
    %20 = arith.cmpi ne, %19, %c0_i32_15 : i32
    scf.if %20 {
      %c0_16 = arith.constant 0 : index
      %c0_17 = arith.constant 0 : index
      %21 = vector.load %arg13[%c0_16, %c0_17] : memref<8x128xf32, #tpu.memory_space<vmem>>, vector<8x128xf32>
      %c0_18 = arith.constant 0 : index
      %c0_19 = arith.constant 0 : index
      %22 = vector.load %arg10[%c0_18, %c0_19] : memref<1x128xf32, #tpu.memory_space<vmem>>, vector<1x128xf32>
      %23 = vector.broadcast %22 : vector<1x128xf32> to vector<8x128xf32>
      %24 = arith.addf %21, %23 : vector<8x128xf32>
      %c0_20 = arith.constant 0 : index
      %c0_21 = arith.constant 0 : index
      %25 = vector.load %arg12[%c0_20, %c0_21] : memref<8x128xf32, #tpu.memory_space<vmem>>, vector<8x128xf32>
      %26 = arith.addf %24, %25 : vector<8x128xf32>
      %c0_22 = arith.constant 0 : index
      %c0_23 = arith.constant 0 : index
      %27 = vector.load %arg5[%c0_22, %c0_23] : memref<1x128xf32, #tpu.memory_space<vmem>>, vector<1x128xf32>
      %c0_24 = arith.constant 0 : index
      %c0_25 = arith.constant 0 : index
      %28 = vector.load %arg6[%c0_24, %c0_25] : memref<1x128xf32, #tpu.memory_space<vmem>>, vector<1x128xf32>
      %cst_26 = arith.constant dense<0.000000e+00> : vector<8xf32>
      %29 = vector.multi_reduction <add>, %26, %cst_26 [1] : vector<8x128xf32> to vector<8xf32>
      %30 = vector.shape_cast %29 : vector<8xf32> to vector<8x1xf32>
      %31 = arith.mulf %26, %26 : vector<8x128xf32>
      %cst_27 = arith.constant dense<0.000000e+00> : vector<8xf32>
      %32 = vector.multi_reduction <add>, %31, %cst_27 [1] : vector<8x128xf32> to vector<8xf32>
      %33 = vector.shape_cast %32 : vector<8xf32> to vector<8x1xf32>
      %cst_28 = arith.constant 3.200000e+01 : f32
      %34 = vector.broadcast %cst_28 : f32 to vector<8x1xf32>
      %35 = arith.divf %30, %34 : vector<8x1xf32>
      %cst_29 = arith.constant 3.200000e+01 : f32
      %36 = vector.broadcast %cst_29 : f32 to vector<8x1xf32>
      %37 = arith.divf %33, %36 : vector<8x1xf32>
      %38 = arith.mulf %35, %35 : vector<8x1xf32>
      %39 = arith.subf %37, %38 : vector<8x1xf32>
      %40 = vector.broadcast %35 : vector<8x1xf32> to vector<8x128xf32>
      %41 = arith.subf %26, %40 : vector<8x128xf32>
      %cst_30 = arith.constant 9.99999974E-6 : f32
      %42 = vector.broadcast %cst_30 : f32 to vector<8x1xf32>
      %43 = arith.addf %39, %42 : vector<8x1xf32>
      %44 = math.rsqrt %43 : vector<8x1xf32>
      %45 = vector.broadcast %44 : vector<8x1xf32> to vector<8x128xf32>
      %46 = arith.mulf %41, %45 : vector<8x128xf32>
      %47 = vector.broadcast %27 : vector<1x128xf32> to vector<8x128xf32>
      %48 = arith.mulf %46, %47 : vector<8x128xf32>
      %49 = vector.broadcast %28 : vector<1x128xf32> to vector<8x128xf32>
      %50 = arith.addf %48, %49 : vector<8x128xf32>
      %c0_31 = arith.constant 0 : index
      %c0_32 = arith.constant 0 : index
      %c0_33 = arith.constant 0 : index
      %51 = vector.load %arg11[%c0_31, %c0_32, %c0_33] : memref<1x8x128xf32, #tpu.memory_space<vmem>>, vector<1x8x128xf32>
      %52 = vector.shape_cast %51 : vector<1x8x128xf32> to vector<8x128xf32>
      %53 = vector.shape_cast %50 : vector<8x128xf32> to vector<1x8x128xf32>
      tpu.vector_store %arg11[%c0_31, %c0_32, %c0_33], %53 {strides = array<i32>} : memref<1x8x128xf32, #tpu.memory_space<vmem>>, vector<1x8x128xf32>,
    } else {
    }
    return
  }
  func.func @transform_0(%arg0: i32, %arg1: i32, %arg2: i32) -> (i32, i32, i32) {
    %c0_i32 = arith.constant 0 : i32
    %c0_i32_0 = arith.constant 0 : i32
    return %arg0, %arg1, %c0_i32 : i32, i32, i32
  }
  func.func @transform_1(%arg0: i32, %arg1: i32, %arg2: i32) -> (i32, i32) {
    %c0_i32 = arith.constant 0 : i32
    %c0_i32_0 = arith.constant 0 : i32
    return %arg1, %c0_i32 : i32, i32
  }
  func.func @transform_2(%arg0: i32, %arg1: i32, %arg2: i32) -> (i32, i32) {
    %c0_i32 = arith.constant 0 : i32
    %c0_i32_0 = arith.constant 0 : i32
    %c0_i32_1 = arith.constant 0 : i32
    return %c0_i32, %c0_i32_0 : i32, i32
  }
  func.func @transform_3(%arg0: i32, %arg1: i32, %arg2: i32) -> (i32, i32) {
    %c0_i32 = arith.constant 0 : i32
    %c0_i32_0 = arith.constant 0 : i32
    %c0_i32_1 = arith.constant 0 : i32
    return %c0_i32, %c0_i32_0 : i32, i32
  }
  func.func @transform_4(%arg0: i32, %arg1: i32, %arg2: i32) -> (i32, i32) {
    %c0_i32 = arith.constant 0 : i32
    %c0_i32_0 = arith.constant 0 : i32
    return %c0_i32, %arg2 : i32, i32
  }
  func.func @transform_5(%arg0: i32, %arg1: i32, %arg2: i32) -> (i32, i32) {
    %c0_i32 = arith.constant 0 : i32
    %c0_i32_0 = arith.constant 0 : i32
    return %c0_i32, %arg2 : i32, i32
  }
  func.func @transform_6(%arg0: i32, %arg1: i32, %arg2: i32) -> (i32, i32) {
    %c0_i32 = arith.constant 0 : i32
    %c0_i32_0 = arith.constant 0 : i32
    return %arg2, %c0_i32 : i32, i32
  }
  func.func @transform_7(%arg0: i32, %arg1: i32, %arg2: i32) -> (i32, i32) {
    %c0_i32 = arith.constant 0 : i32
    %c0_i32_0 = arith.constant 0 : i32
    %c0_i32_1 = arith.constant 0 : i32
    return %c0_i32, %c0_i32_0 : i32, i32
  }
  func.func @transform_8(%arg0: i32, %arg1: i32, %arg2: i32) -> (i32, i32, i32) {
    %c0_i32 = arith.constant 0 : i32
    %c0_i32_0 = arith.constant 0 : i32
    return %arg0, %arg1, %c0_i32 : i32, i32, i32
  }
}

</mosaic_0001>

<llo_original>
// kernel: transformer_block.2
$region0: #{transformer_block.2}
  #allocation0 [shape = 'u32[]', space=smem, size = 0x4, offset = 0x4, fixed_abs, tag = 'smem constant byte address 0x4 - core index']
  #allocation1 [shape = 'u32[144,128]{1,0:T(1,128)}', space=vmem, size = 0x12000, scoped, tag = 'internal scratch']
  %s0 = inlined_call_operand.vmem [shape: f32[8,128], index: 0, kind: input, shape index: {}]
  %s1 = inlined_call_operand.vmem [shape: f32[8,8], index: 1, kind: input, shape index: {}]
  %s2 = inlined_call_operand.vmem [shape: f32[128,128], index: 2, kind: input, shape index: {}]
  %s3 = inlined_call_operand.vmem [shape: f32[1,128], index: 3, kind: input, shape index: {}]
  %s4 = inlined_call_operand.vmem [shape: f32[8,128], index: 4, kind: output, shape index: {}]
  %s5 = sld [smem:[#allocation0]]
  $region26: #{transformer_block.2} parent=0
    _
  %s7 = ssub.s32 1, %s5
  %s8 = scalar_select 0, %s7, %s5
  // Predicated region
  $region2: #{transformer_block.2} parent=0 // pred_check
    _
  $region3: #{transformer_block.2} parent=0 // pred_check_branch
    %10 = sbr.rel (0) target = $region5
  $region4: #{transformer_block.2} parent=0 // pred_region
    _
  $region5: #{transformer_block.2} parent=0 // pred_fallthru
    _
  // Predicated region
  $region6: #{transformer_block.2} parent=0 // pred_check
    _
  $region7: #{transformer_block.2} parent=0 // pred_check_branch
    %12 = sbr.rel (0) target = $region9
  $region8: #{transformer_block.2} parent=0 // pred_region
    _
  $region9: #{transformer_block.2} parent=0 // pred_fallthru
    _
  // Predicated region
  $region10: #{transformer_block.2} parent=0 // pred_check
    _
  $region11: #{transformer_block.2} parent=0 // pred_check_branch
    %14 = sbr.rel (0) target = $region13
  $region12: #{transformer_block.2} parent=0 // pred_region
    _
  $region13: #{transformer_block.2} parent=0 // pred_fallthru
    _
  // Predicated region
  $region14: #{transformer_block.2} parent=0 // pred_check
    _
  $region15: #{transformer_block.2} parent=0 // pred_check_branch
    %16 = sbr.rel (0) target = $region17
  $region16: #{transformer_block.2} parent=0 // pred_region
    _
  $region17: #{transformer_block.2} parent=0 // pred_fallthru
    _
  %v17 = vld [vmem:[%s1] sm:$0xff]
  %vm18 = vcmask 64512
  %v19 = vsel %vm18, %v17, -inf
  %20 = vmax.xlane.f32.xlu0 %v19
  %v21 = vpop.xlane.xlu0 %20
  %v22 = vsub.f32 %v17, %v21
  %v23 = vmul.f32 %v22, 1.442695
  %v24 = vpow.pop %v23
  %v25 = vsel %vm18, %v24, 0.0
  %26 = vadd.xlane.f32.xlu0 %v25
  %v27 = vpop.xlane.xlu0 %26
  %v28 = vrcp.pop %v27
  %v29 = vmul.f32 %v24, %v28
  %v30 = vld [vmem:[%s0] sm:$0xff]
  %v31 = vld [vmem:[%s2] sm:$0xff]
  %v32 = vld [vmem:[%s2 + $0x8] sm:$0xff]
  %v33 = vld [vmem:[%s2 + $0x10] sm:$0xff]
  %v34 = vld [vmem:[%s2 + $0x18] sm:$0xff]
  %v35 = vld [vmem:[%s2 + $0x20] sm:$0xff]
  %v36 = vld [vmem:[%s2 + $0x28] sm:$0xff]
  %v37 = vld [vmem:[%s2 + $0x30] sm:$0xff]
  %v38 = vld [vmem:[%s2 + $0x38] sm:$0xff]
  %v39 = vld [vmem:[%s2 + $0x40] sm:$0xff]
  %v40 = vld [vmem:[%s2 + $0x48] sm:$0xff]
  %v41 = vld [vmem:[%s2 + $0x50] sm:$0xff]
  %v42 = vld [vmem:[%s2 + $0x58] sm:$0xff]
  %v43 = vld [vmem:[%s2 + $0x60] sm:$0xff]
  %v44 = vld [vmem:[%s2 + $0x68] sm:$0xff]
  %v45 = vld [vmem:[%s2 + $0x70] sm:$0xff]
  %v46 = vld [vmem:[%s2 + $0x78] sm:$0xff]
  %v47 = vld [vmem:[%s3] sm:$0x1]
  %v49 = vlaneseq
  %v50 = vshrl.u32 %v49, 7
  %v51 = vsub.s32 0, %v50
  %v52 = vrot.slane %v47, %v51
  %54 = vmatprep.subr.mxu0 0.0
  %55 = vmatpush1.msra.mxu0 %v31
  %56 = vmatprep.subr.mxu0 0.0
  %57 = vmatpush1.msra.mxu0 %v32
  %58 = vmatprep.subr.mxu0 0.0
  %59 = vmatpush1.msra.mxu0 %v33
  %60 = vmatprep.subr.mxu0 0.0
  %61 = vmatpush1.msra.mxu0 %v34
  %62 = vmatprep.subr.mxu0 0.0
  %63 = vmatpush1.msra.mxu0 %v35
  %64 = vmatprep.subr.mxu0 0.0
  %65 = vmatpush1.msra.mxu0 %v36
  %66 = vmatprep.subr.mxu0 0.0
  %67 = vmatpush1.msra.mxu0 %v37
  %68 = vmatprep.subr.mxu0 0.0
  %69 = vmatpush1.msra.mxu0 %v38
  %70 = vmatprep.subr.mxu0 0.0
  %71 = vmatpush1.msra.mxu0 %v39
  %72 = vmatprep.subr.mxu0 0.0
  %73 = vmatpush1.msra.mxu0 %v40
  %74 = vmatprep.subr.mxu0 0.0
  %75 = vmatpush1.msra.mxu0 %v41
  %76 = vmatprep.subr.mxu0 0.0
  %77 = vmatpush1.msra.mxu0 %v42
  %78 = vmatprep.subr.mxu0 0.0
  %79 = vmatpush1.msra.mxu0 %v43
  %80 = vmatprep.subr.mxu0 0.0
  %81 = vmatpush1.msra.mxu0 %v44
  %82 = vmatprep.subr.mxu0 0.0
  %83 = vmatpush1.msra.mxu0 %v45
  %84 = vmatprep.subr.mxu0 0.0
  %85 = vmatpush1.msra.mxu0 %v46
  %86 = vmatprep.subr.mxu0 0.0
  %87 = vmatpush1.msra.mxu0 0.0
  %88 = vmatprep.subr.mxu0 0.0
  %89 = vmatpush1.msra.mxu0 0.0
  %90 = vmatprep.subr.mxu0 0.0
  %91 = vmatpush1.msra.mxu0 0.0
  %92 = vmatprep.subr.mxu0 0.0
  %93 = vmatpush1.msra.mxu0 0.0
  %94 = vmatprep.subr.mxu0 0.0
  %95 = vmatpush1.msra.mxu0 0.0
  %96 = vmatprep.subr.mxu0 0.0
  %97 = vmatpush1.msra.mxu0 0.0
  %98 = vmatprep.subr.mxu0 0.0
  %99 = vmatpush1.msra.mxu0 0.0
  %100 = vmatprep.subr.mxu0 0.0
  %101 = vmatpush1.msra.mxu0 0.0
  %102 = vmatprep.subr.mxu0 0.0
  %103 = vmatpush1.msra.mxu0 0.0
  %104 = vmatprep.subr.mxu0 0.0
  %105 = vmatpush1.msra.mxu0 0.0
  %106 = vmatprep.subr.mxu0 0.0
  %107 = vmatpush1.msra.mxu0 0.0
  %108 = vmatprep.subr.mxu0 0.0
  %109 = vmatpush1.msra.mxu0 0.0
  %110 = vmatprep.subr.mxu0 0.0
  %111 = vmatpush1.msra.mxu0 0.0
  %112 = vmatprep.subr.mxu0 0.0
  %113 = vmatpush1.msra.mxu0 0.0
  %114 = vmatprep.subr.mxu0 0.0
  %115 = vmatpush1.msra.mxu0 0.0
  %116 = vmatprep.subr.mxu0 0.0
  %117 = vmatpush1.msra.mxu0 0.0
  %118 = vmatprep.mubr.f32.mxu0 0.0
  %119 = vmatmul.mubr.f32.gmra.mrb[0].mxu0 %v30
  %v120 = vpop.f32.mrb[0].mxu0
  %v121 = vadd.f32 %v52, %v120
  %v122 = vpop.f32.mrb[0].mxu0
  %123 = vdwg.mxu0
  %v125 = vsel %vm18, %v29, 0
  %127 = vmatprep.subr.mxu0 0.0
  %128 = vmatpush1.msra.mxu0 %v121
  %129 = vmatprep.subr.mxu0 0.0
  %130 = vmatpush1.msra.mxu0 0.0
  %131 = vmatprep.subr.mxu0 0.0
  %132 = vmatpush1.msra.mxu0 0.0
  %133 = vmatprep.subr.mxu0 0.0
  %134 = vmatpush1.msra.mxu0 0.0
  %135 = vmatprep.subr.mxu0 0.0
  %136 = vmatpush1.msra.mxu0 0.0
  %137 = vmatprep.subr.mxu0 0.0
  %138 = vmatpush1.msra.mxu0 0.0
  %139 = vmatprep.subr.mxu0 0.0
  %140 = vmatpush1.msra.mxu0 0.0
  %141 = vmatprep.subr.mxu0 0.0
  %142 = vmatpush1.msra.mxu0 0.0
  %143 = vmatprep.subr.mxu0 0.0
  %144 = vmatpush1.msra.mxu0 0.0
  %145 = vmatprep.subr.mxu0 0.0
  %146 = vmatpush1.msra.mxu0 0.0
  %147 = vmatprep.subr.mxu0 0.0
  %148 = vmatpush1.msra.mxu0 0.0
  %149 = vmatprep.subr.mxu0 0.0
  %150 = vmatpush1.msra.mxu0 0.0
  %151 = vmatprep.subr.mxu0 0.0
  %152 = vmatpush1.msra.mxu0 0.0
  %153 = vmatprep.subr.mxu0 0.0
  %154 = vmatpush1.msra.mxu0 0.0
  %155 = vmatprep.subr.mxu0 0.0
  %156 = vmatpush1.msra.mxu0 0.0
  %157 = vmatprep.subr.mxu0 0.0
  %158 = vmatpush1.msra.mxu0 0.0
  %159 = vmatprep.subr.mxu0 0.0
  %160 = vmatpush1.msra.mxu0 0.0
  %161 = vmatprep.subr.mxu0 0.0
  %162 = vmatpush1.msra.mxu0 0.0
  %163 = vmatprep.subr.mxu0 0.0
  %164 = vmatpush1.msra.mxu0 0.0
  %165 = vmatprep.subr.mxu0 0.0
  %166 = vmatpush1.msra.mxu0 0.0
  %167 = vmatprep.subr.mxu0 0.0
  %168 = vmatpush1.msra.mxu0 0.0
  %169 = vmatprep.subr.mxu0 0.0
  %170 = vmatpush1.msra.mxu0 0.0
  %171 = vmatprep.subr.mxu0 0.0
  %172 = vmatpush1.msra.mxu0 0.0
  %173 = vmatprep.subr.mxu0 0.0
  %174 = vmatpush1.msra.mxu0 0.0
  %175 = vmatprep.subr.mxu0 0.0
  %176 = vmatpush1.msra.mxu0 0.0
  %177 = vmatprep.subr.mxu0 0.0
  %178 = vmatpush1.msra.mxu0 0.0
  %179 = vmatprep.subr.mxu0 0.0
  %180 = vmatpush1.msra.mxu0 0.0
  %181 = vmatprep.subr.mxu0 0.0
  %182 = vmatpush1.msra.mxu0 0.0
  %183 = vmatprep.subr.mxu0 0.0
  %184 = vmatpush1.msra.mxu0 0.0
  %185 = vmatprep.subr.mxu0 0.0
  %186 = vmatpush1.msra.mxu0 0.0
  %187 = vmatprep.subr.mxu0 0.0
  %188 = vmatpush1.msra.mxu0 0.0
  %189 = vmatprep.subr.mxu0 0.0
  %190 = vmatpush1.msra.mxu0 0.0
  %191 = vmatprep.mubr.f32.mxu0 0.0
  %192 = vmatmul.mubr.f32.gmra.mrb[0].mxu0 %v125
  %v193 = vpop.f32.mrb[0].mxu0
  %v194 = vadd.f32 0.0, %v193
  %v195 = vpop.f32.mrb[0].mxu0
  %196 = vdwg.mxu0
  %197 = vst [vmem:[%s4] sm:$0xff] %v194
  // Predicated region
  $region18: #{transformer_block.2} parent=0 // pred_check
    _
  $region19: #{transformer_block.2} parent=0 // pred_check_branch
    %199 = sbr.rel (0) target = $region21
  $region20: #{transformer_block.2} parent=0 // pred_region
    _
  $region21: #{transformer_block.2} parent=0 // pred_fallthru
    _
  // Predicated region
  $region22: #{transformer_block.2} parent=0 // pred_check
    _
  $region23: #{transformer_block.2} parent=0 // pred_check_branch
    %201 = sbr.rel (0) target = $region25
  $region24: #{transformer_block.2} parent=0 // pred_region
    _
  $region25: #{transformer_block.2} parent=0 // pred_fallthru
    _

// kernel: transformer_block.3
$region0: #{transformer_block.3}
  #allocation0 [shape = 'u32[]', space=smem, size = 0x4, offset = 0x4, fixed_abs, tag = 'smem constant byte address 0x4 - core index']
  #allocation1 [shape = 'u32[144,128]{1,0:T(1,128)}', space=vmem, size = 0x12000, scoped, tag = 'internal scratch']
  #allocation2 [shape = 'f32[8,128]{1,0:T(8,128)}', space=vmem, size = 0x1000, scoped, tag = 'scratch operand']
  #allocation3 [shape = 'f32[8,128]{1,0:T(8,128)}', space=vmem, size = 0x1000, scoped, tag = 'scratch operand']
  %s0 = inlined_call_operand.vmem [shape: f32[2,8,128], index: 0, kind: input, shape index: {}]
  %s1 = inlined_call_operand.vmem [shape: f32[8,128], index: 1, kind: input, shape index: {}]
  %s2 = inlined_call_operand.vmem [shape: f32[1,128], index: 2, kind: input, shape index: {}]
  %s3 = inlined_call_operand.vmem [shape: f32[1,128], index: 3, kind: input, shape index: {}]
  %s4 = inlined_call_operand.vmem [shape: bf16[128,128], index: 4, kind: input, shape index: {}]
  %s5 = inlined_call_operand.vmem [shape: f32[1,128], index: 5, kind: input, shape index: {}]
  %s6 = inlined_call_operand.vmem [shape: bf16[128,128], index: 6, kind: input, shape index: {}]
  %s7 = inlined_call_operand.vmem [shape: f32[1,128], index: 7, kind: input, shape index: {}]
  %s8 = inlined_call_operand.hbm [shape: f32[2,8,128], index: 8, kind: output, shape index: {}]
  %s9 = sld [smem:[#allocation0]]
  $region73: #{transformer_block.3} parent=0
    _
  %s11 = ssub.s32 1, %s9
  %s12 = scalar_select 0, %s11, %s9
  $region1: #{transformer_block.3} parent=0
    #allocation4 [shape = 'u8[8192]{0}', space=vmem, size = 0x2000, scoped, tag = 'output window, operand 0']
    #allocation5 [shape = 's32[2]{0}', space=sflag, size = 0x8, scoped, tag = 'scoped memory for transformer_block.3']
    %13 = vsyncpa [#allocation5], 0
    %s14 = scalar_lea.sflag [#allocation5], 1
    %15 = vsyncpa %s14, 0
    loop: start=0, step=1, limit=4
    $region2: #{transformer_block.3} parent=1 // loop_pre_header
      _
    $region3: #{transformer_block.3} parent=1 // loop_header
      %s17 = sphi 0, %s21
      %p18 = scmp.ge.s32.totalorder %s17, 4
      %s24 = sphi 0, %s43
      %s25 = sphi 0, %s39
      %s26 = sphi 0, %s35
      %s27 = sphi 0, %s24
      %s28 = sphi 0, %s25
      %s29 = sphi 0, %s26
      %s30 = sphi 0, %s27
      %s31 = sphi 0, %s28
      %s32 = sphi 0, %s29
      %s48 = sphi 0, %s50
      %s51 = sphi 0, %s48
      %s52 = sphi 0, %s51
      %s68 = sphi 0, %s52
      %s74 = sphi 0, %s76
      %s77 = sphi 0, %s74
      %s78 = sphi 0, %s77
      %s94 = sphi 0, %s78
      %s98 = sphi 0, %s98
      %s100 = sphi 0, %s98
      %s101 = sphi 0, %s100
      %s115 = sphi 0, %s101
      %s119 = sphi 0, %s119
      %s121 = sphi 0, %s119
      %s122 = sphi 0, %s121
      %s136 = sphi 0, %s122
      %s142 = sphi 0, %s144
      %s145 = sphi 0, %s142
      %s146 = sphi 0, %s145
      %s162 = sphi 0, %s146
      %s168 = sphi 0, %s170
      %s171 = sphi 0, %s168
      %s172 = sphi 0, %s171
      %s188 = sphi 0, %s172
      %s194 = sphi 0, %s196
      %s197 = sphi 0, %s194
      %s198 = sphi 0, %s197
      %s214 = sphi 0, %s198
      %s218 = sphi 0, %s218
      %s220 = sphi 0, %s218
      %s221 = sphi 0, %s220
      %s235 = sphi 0, %s221
      %s243 = sphi 0, %s245
      %s246 = sphi 0, %s243
      %s247 = sphi 0, %s246
      %s263 = sphi 0, %s247
    $region4: #{transformer_block.3} parent=1 // loop_header_branch
      %20 = sbr.rel (%p18) target = $region8
    $region5: #{transformer_block.3} parent=1 // loop_body
      %s22 = ssub.s32 %s17, 1
      %s23 = ssub.s32 %s17, 2
      %s33 = sadd.s32 1, %s26
      %p34 = scmp.ge.s32.totalorder %s33, 1
      %s35 = scalar_select %p34, 0, %s33
      %s36 = sadd.s32 1, %s25
      %s37 = scalar_select %p34, %s36, %s25
      %p38 = scmp.ge.s32.totalorder %s37, 1
      %s39 = scalar_select %p38, 0, %s37
      %s40 = sadd.s32 1, %s24
      %s41 = scalar_select %p38, %s40, %s24
      %p42 = scmp.ge.s32.totalorder %s41, 2
      %s43 = scalar_select %p42, 0, %s41
      %s44 = ssub.s32 %s24, %s43
      %s45 = ssub.s32 %s25, %s39
      %s46 = sor.u32 %s44, %s45
      %p47 = scmp.eq.s32.totalorder %s46, 0
      %s49 = sadd.s32 %s48, 1
      %s50 = scalar_select %p47, %s48, %s49
      %p53 = pneg %p47
      %p54 = scmp.eq.s32.totalorder %s17, 1
      %p55 = por %p53, %p54
      %p56 = scmp.ne.s32.totalorder %s48, %s51
      %p57 = scmp.eq.s32.totalorder %s17, 0
      %p58 = por %p56, %p57
      %p59 = scmp.ne.s32.totalorder %s48, %s51
      %p60 = scmp.eq.s32.totalorder %s22, 1
      %p61 = por %p59, %p60
      %p62 = scmp.ne.s32.totalorder %s51, %s52
      %p63 = scmp.eq.s32.totalorder %s22, 0
      %p64 = por %p62, %p63
      %p65 = scmp.ne.s32.totalorder %s51, %s52
      %p66 = scmp.eq.s32.totalorder %s23, 1
      %p67 = por %p65, %p66
      %p69 = scmp.ne.s32.totalorder %s52, %s68
      %p70 = scmp.eq.s32.totalorder %s23, 0
      %p71 = por %p69, %p70
      %s72 = ssub.s32 %s25, %s39
      %p73 = scmp.eq.s32.totalorder %s72, 0
      %s75 = sadd.s32 %s74, 1
      %s76 = scalar_select %p73, %s74, %s75
      %p79 = pneg %p73
      %p80 = scmp.eq.s32.totalorder %s17, 1
      %p81 = por %p79, %p80
      %p82 = scmp.ne.s32.totalorder %s74, %s77
      %p83 = scmp.eq.s32.totalorder %s17, 0
      %p84 = por %p82, %p83
      %p85 = scmp.ne.s32.totalorder %s74, %s77
      %p86 = scmp.eq.s32.totalorder %s22, 1
      %p87 = por %p85, %p86
      %p88 = scmp.ne.s32.totalorder %s77, %s78
      %p89 = scmp.eq.s32.totalorder %s22, 0
      %p90 = por %p88, %p89
      %p91 = scmp.ne.s32.totalorder %s77, %s78
      %p92 = scmp.eq.s32.totalorder %s23, 1
      %p93 = por %p91, %p92
      %p95 = scmp.ne.s32.totalorder %s78, %s94
      %p96 = scmp.eq.s32.totalorder %s23, 0
      %p97 = por %p95, %p96
      %s99 = sadd.s32 %s98, 1
      %p102 = scmp.eq.s32.totalorder %s17, 1
      %p103 = scmp.ne.s32.totalorder %s98, %s100
      %p104 = scmp.eq.s32.totalorder %s17, 0
      %p105 = por %p103, %p104
      %p106 = scmp.ne.s32.totalorder %s98, %s100
      %p107 = scmp.eq.s32.totalorder %s22, 1
      %p108 = por %p106, %p107
      %p109 = scmp.ne.s32.totalorder %s100, %s101
      %p110 = scmp.eq.s32.totalorder %s22, 0
      %p111 = por %p109, %p110
      %p112 = scmp.ne.s32.totalorder %s100, %s101
      %p113 = scmp.eq.s32.totalorder %s23, 1
      %p114 = por %p112, %p113
      %p116 = scmp.ne.s32.totalorder %s101, %s115
      %p117 = scmp.eq.s32.totalorder %s23, 0
      %p118 = por %p116, %p117
      %s120 = sadd.s32 %s119, 1
      %p123 = scmp.eq.s32.totalorder %s17, 1
      %p124 = scmp.ne.s32.totalorder %s119, %s121
      %p125 = scmp.eq.s32.totalorder %s17, 0
      %p126 = por %p124, %p125
      %p127 = scmp.ne.s32.totalorder %s119, %s121
      %p128 = scmp.eq.s32.totalorder %s22, 1
      %p129 = por %p127, %p128
      %p130 = scmp.ne.s32.totalorder %s121, %s122
      %p131 = scmp.eq.s32.totalorder %s22, 0
      %p132 = por %p130, %p131
      %p133 = scmp.ne.s32.totalorder %s121, %s122
      %p134 = scmp.eq.s32.totalorder %s23, 1
      %p135 = por %p133, %p134
      %p137 = scmp.ne.s32.totalorder %s122, %s136
      %p138 = scmp.eq.s32.totalorder %s23, 0
      %p139 = por %p137, %p138
      %s140 = ssub.s32 %s26, %s35
      %p141 = scmp.eq.s32.totalorder %s140, 0
      %s143 = sadd.s32 %s142, 1
      %s144 = scalar_select %p141, %s142, %s143
      %p147 = pneg %p141
      %p148 = scmp.eq.s32.totalorder %s17, 1
      %p149 = por %p147, %p148
      %p150 = scmp.ne.s32.totalorder %s142, %s145
      %p151 = scmp.eq.s32.totalorder %s17, 0
      %p152 = por %p150, %p151
      %p153 = scmp.ne.s32.totalorder %s142, %s145
      %p154 = scmp.eq.s32.totalorder %s22, 1
      %p155 = por %p153, %p154
      %p156 = scmp.ne.s32.totalorder %s145, %s146
      %p157 = scmp.eq.s32.totalorder %s22, 0
      %p158 = por %p156, %p157
      %p159 = scmp.ne.s32.totalorder %s145, %s146
      %p160 = scmp.eq.s32.totalorder %s23, 1
      %p161 = por %p159, %p160
      %p163 = scmp.ne.s32.totalorder %s146, %s162
      %p164 = scmp.eq.s32.totalorder %s23, 0
      %p165 = por %p163, %p164
      %s166 = ssub.s32 %s26, %s35
      %p167 = scmp.eq.s32.totalorder %s166, 0
      %s169 = sadd.s32 %s168, 1
      %s170 = scalar_select %p167, %s168, %s169
      %p173 = pneg %p167
      %p174 = scmp.eq.s32.totalorder %s17, 1
      %p175 = por %p173, %p174
      %p176 = scmp.ne.s32.totalorder %s168, %s171
      %p177 = scmp.eq.s32.totalorder %s17, 0
      %p178 = por %p176, %p177
      %p179 = scmp.ne.s32.totalorder %s168, %s171
      %p180 = scmp.eq.s32.totalorder %s22, 1
      %p181 = por %p179, %p180
      %p182 = scmp.ne.s32.totalorder %s171, %s172
      %p183 = scmp.eq.s32.totalorder %s22, 0
      %p184 = por %p182, %p183
      %p185 = scmp.ne.s32.totalorder %s171, %s172
      %p186 = scmp.eq.s32.totalorder %s23, 1
      %p187 = por %p185, %p186
      %p189 = scmp.ne.s32.totalorder %s172, %s188
      %p190 = scmp.eq.s32.totalorder %s23, 0
      %p191 = por %p189, %p190
      %s192 = ssub.s32 %s26, %s35
      %p193 = scmp.eq.s32.totalorder %s192, 0
      %s195 = sadd.s32 %s194, 1
      %s196 = scalar_select %p193, %s194, %s195
      %p199 = pneg %p193
      %p200 = scmp.eq.s32.totalorder %s17, 1
      %p201 = por %p199, %p200
      %p202 = scmp.ne.s32.totalorder %s194, %s197
      %p203 = scmp.eq.s32.totalorder %s17, 0
      %p204 = por %p202, %p203
      %p205 = scmp.ne.s32.totalorder %s194, %s197
      %p206 = scmp.eq.s32.totalorder %s22, 1
      %p207 = por %p205, %p206
      %p208 = scmp.ne.s32.totalorder %s197, %s198
      %p209 = scmp.eq.s32.totalorder %s22, 0
      %p210 = por %p208, %p209
      %p211 = scmp.ne.s32.totalorder %s197, %s198
      %p212 = scmp.eq.s32.totalorder %s23, 1
      %p213 = por %p211, %p212
      %p215 = scmp.ne.s32.totalorder %s198, %s214
      %p216 = scmp.eq.s32.totalorder %s23, 0
      %p217 = por %p215, %p216
      %s219 = sadd.s32 %s218, 1
      %p222 = scmp.eq.s32.totalorder %s17, 1
      %p223 = scmp.ne.s32.totalorder %s218, %s220
      %p224 = scmp.eq.s32.totalorder %s17, 0
      %p225 = por %p223, %p224
      %p226 = scmp.ne.s32.totalorder %s218, %s220
      %p227 = scmp.eq.s32.totalorder %s22, 1
      %p228 = por %p226, %p227
      %p229 = scmp.ne.s32.totalorder %s220, %s221
      %p230 = scmp.eq.s32.totalorder %s22, 0
      %p231 = por %p229, %p230
      %p232 = scmp.ne.s32.totalorder %s220, %s221
      %p233 = scmp.eq.s32.totalorder %s23, 1
      %p234 = por %p232, %p233
      %p236 = scmp.ne.s32.totalorder %s221, %s235
      %p237 = scmp.eq.s32.totalorder %s23, 0
      %p238 = por %p236, %p237
      %s239 = ssub.s32 %s24, %s43
      %s240 = ssub.s32 %s25, %s39
      %s241 = sor.u32 %s239, %s240
      %p242 = scmp.eq.s32.totalorder %s241, 0
      %s244 = sadd.s32 %s243, 1
      %s245 = scalar_select %p242, %s243, %s244
      %p248 = pneg %p242
      %p249 = scmp.eq.s32.totalorder %s17, 1
      %p250 = por %p248, %p249
      %p251 = scmp.ne.s32.totalorder %s243, %s246
      %p252 = scmp.eq.s32.totalorder %s17, 0
      %p253 = por %p251, %p252
      %p254 = scmp.ne.s32.totalorder %s243, %s246
      %p255 = scmp.eq.s32.totalorder %s22, 1
      %p256 = por %p254, %p255
      %p257 = scmp.ne.s32.totalorder %s246, %s247
      %p258 = scmp.eq.s32.totalorder %s22, 0
      %p259 = por %p257, %p258
      %p260 = scmp.ne.s32.totalorder %s246, %s247
      %p261 = scmp.eq.s32.totalorder %s23, 1
      %p262 = por %p260, %p261
      %p264 = scmp.ne.s32.totalorder %s247, %s263
      %p265 = scmp.eq.s32.totalorder %s23, 0
      %p266 = por %p264, %p265
      %p267 = scmp.le.s32.totalorder 1, %s17
      %p268 = scmp.lt.s32.totalorder %s17, 3
      %p269 = pnand %p267, %p268
      %p270 = pneg %p269
      // Predicated region
      $region9: #{transformer_block.3} parent=5 // pred_check
        _
      $region10: #{transformer_block.3} parent=5 // pred_check_branch
        %272 = sbr.rel (%p269) target = $region12
      $region11: #{transformer_block.3} parent=5 // pred_region
        %s273 = ssub.s32 %s17, 1
        // Predicated region
        $region13: #{transformer_block.3} parent=11 // pred_check
          %p274 = pneg %p90
        $region14: #{transformer_block.3} parent=11 // pred_check_branch
          %276 = sbr.rel (%p274) target = $region16
        $region15: #{transformer_block.3} parent=11 // pred_region
          %p277 = scmp.lt.s32.totalorder %s28, 0
          %s278 = scalar_select %p277, %s28, 0
          %s279 = smul.addr %s278, 8
          %s280 = scalar_lea.vmem %s1, %s279
        $region16: #{transformer_block.3} parent=11 // pred_fallthru
          _
        // Predicated region
        $region17: #{transformer_block.3} parent=11 // pred_check
          %p281 = pneg %p111
        $region18: #{transformer_block.3} parent=11 // pred_check_branch
          %283 = sbr.rel (%p281) target = $region20
        $region19: #{transformer_block.3} parent=11 // pred_region
          _
        $region20: #{transformer_block.3} parent=11 // pred_fallthru
          _
        // Predicated region
        $region21: #{transformer_block.3} parent=11 // pred_check
          %p284 = pneg %p132
        $region22: #{transformer_block.3} parent=11 // pred_check_branch
          %286 = sbr.rel (%p284) target = $region24
        $region23: #{transformer_block.3} parent=11 // pred_region
          _
        $region24: #{transformer_block.3} parent=11 // pred_fallthru
          _
        // Predicated region
        $region25: #{transformer_block.3} parent=11 // pred_check
          %p287 = pneg %p158
        $region26: #{transformer_block.3} parent=11 // pred_check_branch
          %289 = sbr.rel (%p287) target = $region28
        $region27: #{transformer_block.3} parent=11 // pred_region
          %p290 = scmp.lt.s32.totalorder %s29, 0
          %s291 = scalar_select %p290, %s29, 0
          %s292 = smul.addr %s291, 4
          %s293 = scalar_lea.vmem %s4, %s292
        $region28: #{transformer_block.3} parent=11 // pred_fallthru
          _
        // Predicated region
        $region29: #{transformer_block.3} parent=11 // pred_check
          %p294 = pneg %p184
        $region30: #{transformer_block.3} parent=11 // pred_check_branch
          %296 = sbr.rel (%p294) target = $region32
        $region31: #{transformer_block.3} parent=11 // pred_region
          %p297 = scmp.lt.s32.totalorder %s29, 0
          %s298 = scalar_select %p297, %s29, 0
          %s299 = scalar_lea.vmem %s5, %s298
        $region32: #{transformer_block.3} parent=11 // pred_fallthru
          _
        // Predicated region
        $region33: #{transformer_block.3} parent=11 // pred_check
          %p300 = pneg %p210
        $region34: #{transformer_block.3} parent=11 // pred_check_branch
          %302 = sbr.rel (%p300) target = $region36
        $region35: #{transformer_block.3} parent=11 // pred_region
          %s303 = smul.u32 16, %s29
          %p304 = scmp.lt.s32.totalorder %s303, 15
          %s305 = scalar_select %p304, %s303, 15
          %s306 = smul.addr %s305, 4
          %s307 = scalar_lea.vmem %s6, %s306
          %s308 = smul.u32 16, %s29
        $region36: #{transformer_block.3} parent=11 // pred_fallthru
          _
        // Predicated region
        $region37: #{transformer_block.3} parent=11 // pred_check
          %p309 = pneg %p231
        $region38: #{transformer_block.3} parent=11 // pred_check_branch
          %311 = sbr.rel (%p309) target = $region40
        $region39: #{transformer_block.3} parent=11 // pred_region
          _
        $region40: #{transformer_block.3} parent=11 // pred_fallthru
          _
      $region12: #{transformer_block.3} parent=5 // pred_fallthru
        _
      %p312 = scmp.lt.s32.totalorder %s17, 2
      // Predicated region
      $region41: #{transformer_block.3} parent=5 // pred_check
        %p313 = pneg %p312
      $region42: #{transformer_block.3} parent=5 // pred_check_branch
        %315 = sbr.rel (%p313) target = $region44
      $region43: #{transformer_block.3} parent=5 // pred_region
        // Predicated region
        $region45: #{transformer_block.3} parent=43 // pred_check
          %p316 = pneg %p58
        $region46: #{transformer_block.3} parent=43 // pred_check_branch
          %318 = sbr.rel (%p316) target = $region48
        $region47: #{transformer_block.3} parent=43 // pred_region
          %p319 = scmp.lt.s32.totalorder %s24, 1
          %s320 = scalar_select %p319, %s24, 1
          %p321 = scmp.lt.s32.totalorder %s25, 0
          %s322 = scalar_select %p321, %s25, 0
          %s323 = sadd.s32 %s322, %s320
          %s324 = smul.addr %s323, 8
          %s325 = scalar_lea.vmem %s0, %s324
        $region48: #{transformer_block.3} parent=43 // pred_fallthru
          _
      $region44: #{transformer_block.3} parent=5 // pred_fallthru
        _
      %p326 = scmp.le.s32.totalorder 1, %s17
      %p327 = scmp.lt.s32.totalorder %s17, 3
      %p328 = pnand %p326, %p327
      %p329 = pneg %p328
      // Predicated region
      $region49: #{transformer_block.3} parent=5 // pred_check
        _
      $region50: #{transformer_block.3} parent=5 // pred_check_branch
        %331 = sbr.rel (%p328) target = $region52
      $region51: #{transformer_block.3} parent=5 // pred_region
        %s332 = ssub.s32 %s17, 1
        %p333 = scmp.lt.s32.totalorder %s27, 1
        %s334 = scalar_select %p333, %s27, 1
        %p335 = scmp.lt.s32.totalorder %s28, 0
        %s336 = scalar_select %p335, %s28, 0
        %s337 = sadd.s32 %s336, %s334
        %s338 = smul.addr %s337, 8
        %s339 = scalar_lea.vmem %s0, %s338
        %p340 = pneg %p64
        %p341 = pneg %p61
        %p342 = scmp.lt.s32.totalorder %s28, 0
        %s343 = scalar_select %p342, %s28, 0
        %s344 = smul.addr %s343, 8
        %s345 = scalar_lea.vmem %s1, %s344
        %p346 = pneg %p90
        %p347 = pneg %p87
        %p348 = pneg %p111
        %p349 = pneg %p108
        %p350 = pneg %p132
        %p351 = pneg %p129
        %p352 = scmp.lt.s32.totalorder %s29, 0
        %s353 = scalar_select %p352, %s29, 0
        %s354 = smul.addr %s353, 4
        %s355 = scalar_lea.vmem %s4, %s354
        %p356 = pneg %p158
        %p357 = pneg %p155
        %p358 = scmp.lt.s32.totalorder %s29, 0
        %s359 = scalar_select %p358, %s29, 0
        %s360 = scalar_lea.vmem %s5, %s359
        %p361 = pneg %p184
        %p362 = pneg %p181
        %s363 = smul.u32 16, %s29
        %p364 = scmp.lt.s32.totalorder %s363, 15
        %s365 = scalar_select %p364, %s363, 15
        %s366 = smul.addr %s365, 4
        %s367 = scalar_lea.vmem %s6, %s366
        %p368 = pneg %p210
        %p369 = pneg %p207
        %p370 = pneg %p231
        %p371 = pneg %p228
        %p372 = pneg %p259
        %p373 = pneg %p256
        %s374 = sand.u32 %s246, 1
        %s375 = scalar_lea.sflag [#allocation5], %s374
        %s376 = sand.u32 %s246, 1
        %s377 = smul.addr %s376, 8
        %s378 = scalar_lea.vmem [#allocation4], %s377
        %p379 = scmp.lt.s32.totalorder %s27, 1
        %s380 = scalar_select %p379, %s27, 1
        %p381 = scmp.lt.s32.totalorder %s28, 0
        %s382 = scalar_select %p381, %s28, 0
        %s383 = sadd.s32 %s382, %s380
        %s384 = smul.addr %s383, 8
        %s385 = scalar_lea.vmem %s0, %s384
        %p386 = scmp.lt.s32.totalorder %s28, 0
        %s387 = scalar_select %p386, %s28, 0
        %s388 = smul.addr %s387, 8
        %s389 = scalar_lea.vmem %s1, %s388
        %p390 = scmp.lt.s32.totalorder %s29, 0
        %s391 = scalar_select %p390, %s29, 0
        %s392 = smul.addr %s391, 4
        %s393 = scalar_lea.vmem %s4, %s392
        %p394 = scmp.lt.s32.totalorder %s29, 0
        %s395 = scalar_select %p394, %s29, 0
        %s396 = scalar_lea.vmem %s5, %s395
        %s397 = smul.u32 16, %s29
        %p398 = scmp.lt.s32.totalorder %s397, 15
        %s399 = scalar_select %p398, %s397, 15
        %s400 = smul.addr %s399, 4
        %s401 = scalar_lea.vmem %s6, %s400
        %s402 = smul.u32 16, %s29
        %p404 = scmp.eq.s32.totalorder %s29, 0
        // Predicated region
        $region53: #{transformer_block.3} parent=51 // pred_check
          %p405 = pneg %p404
        $region54: #{transformer_block.3} parent=51 // pred_check_branch
          %407 = sbr.rel (%p405) target = $region56
        $region55: #{transformer_block.3} parent=51 // pred_region
          %v408 = vld [vmem:[%s385] sm:$0xff]
          %v409 = vld [vmem:[%s389] sm:$0xff]
          %v410 = vadd.f32 %v408, %v409
          %v411 = vld [vmem:[%s2] sm:$0x1]
          %v412 = vld [vmem:[%s3] sm:$0x1]
          %413 = vadd.xlane.f32.xlu0 %v410
          %v414 = vpop.xlane.xlu0 %413
          %v415 = vmul.f32 %v410, %v410
          %416 = vadd.xlane.f32.xlu0 %v415
          %v417 = vpop.xlane.xlu0 %416
          %v418 = vrcp.pop 32.0
          %v419 = vmul.f32 %v414, %v418
          %v420 = vmul.f32 %v417, %v418
          %v421 = vmul.f32 %v419, %v419
          %v422 = vsub.f32 %v420, %v421
          %v423 = vsub.f32 %v410, %v419
          %v424 = vadd.f32 %v422, 1e-05
          %v425 = vrsqrt.pop %v424
          %v426 = vmul.f32 %v423, %v425
          %v428 = vlaneseq
          %v429 = vshrl.u32 %v428, 7
          %v430 = vsub.s32 0, %v429
          %v431 = vrot.slane %v411, %v430
          %v433 = vmul.f32 %v426, %v431
          %v435 = vlaneseq
          %v436 = vshrl.u32 %v435, 7
          %v437 = vsub.s32 0, %v436
          %v438 = vrot.slane %v412, %v437
          %v440 = vadd.f32 %v433, %v438
          %441 = vst [vmem:[#allocation2] sm:$0xff] %v440
          %442 = vst [vmem:[#allocation3] sm:$0xff] 0.0
        $region56: #{transformer_block.3} parent=51 // pred_fallthru
          _
        %v443 = vld [vmem:[#allocation2] sm:$0xff]
        %v444 = vpack.c.bf16 %v443, %v443
        %v445 = vld [vmem:[%s393] sm:$0xf]
        %v446 = vld [vmem:[%s393 + $0x4] sm:$0xf]
        %v447 = vld [vmem:[%s393 + $0x8] sm:$0xf]
        %v448 = vld [vmem:[%s393 + $0xc] sm:$0xf]
        %v449 = vld [vmem:[%s393 + $0x10] sm:$0xf]
        %v450 = vld [vmem:[%s393 + $0x14] sm:$0xf]
        %v451 = vld [vmem:[%s393 + $0x18] sm:$0xf]
        %v452 = vld [vmem:[%s393 + $0x1c] sm:$0xf]
        %v453 = vld [vmem:[%s393 + $0x20] sm:$0xf]
        %v454 = vld [vmem:[%s393 + $0x24] sm:$0xf]
        %v455 = vld [vmem:[%s393 + $0x28] sm:$0xf]
        %v456 = vld [vmem:[%s393 + $0x2c] sm:$0xf]
        %v457 = vld [vmem:[%s393 + $0x30] sm:$0xf]
        %v458 = vld [vmem:[%s393 + $0x34] sm:$0xf]
        %v459 = vld [vmem:[%s393 + $0x38] sm:$0xf]
        %v460 = vld [vmem:[%s393 + $0x3c] sm:$0xf]
        %v461 = vld [vmem:[%s396] sm:$0x1]
        %v463 = vlaneseq
        %v464 = vshrl.u32 %v463, 7
        %v465 = vsub.s32 0, %v464
        %v466 = vrot.slane %v461, %v465
        %v484 = vunpack.c.l.b16 %v445
        %v485 = vunpack.c.l.b16 %v446
        %v486 = vunpack.c.l.b16 %v447
        %v487 = vunpack.c.l.b16 %v448
        %v488 = vunpack.c.l.b16 %v449
        %v489 = vunpack.c.l.b16 %v450
        %v490 = vunpack.c.l.b16 %v451
        %v491 = vunpack.c.l.b16 %v452
        %v492 = vunpack.c.l.b16 %v453
        %v493 = vunpack.c.l.b16 %v454
        %v494 = vunpack.c.l.b16 %v455
        %v495 = vunpack.c.l.b16 %v456
        %v496 = vunpack.c.l.b16 %v457
        %v497 = vunpack.c.l.b16 %v458
        %v498 = vunpack.c.l.b16 %v459
        %v499 = vunpack.c.l.b16 %v460
        %v500 = vpack.c.b16 %v485, %v484
        %v501 = vpack.c.b16 %v487, %v486
        %v502 = vpack.c.b16 %v489, %v488
        %v503 = vpack.c.b16 %v491, %v490
        %v504 = vpack.c.b16 %v493, %v492
        %v505 = vpack.c.b16 %v495, %v494
        %v506 = vpack.c.b16 %v497, %v496
        %v507 = vpack.c.b16 %v499, %v498
        %516 = vmatprep.subr.bf16.mxu0 0
        %517 = vmatpush1.bf16.msra.mxu0 %v500
        %518 = vmatprep.subr.bf16.mxu0 0
        %519 = vmatpush1.bf16.msra.mxu0 %v501
        %520 = vmatprep.subr.bf16.mxu0 0
        %521 = vmatpush1.bf16.msra.mxu0 %v502
        %522 = vmatprep.subr.bf16.mxu0 0
        %523 = vmatpush1.bf16.msra.mxu0 %v503
        %524 = vmatprep.subr.bf16.mxu0 0
        %525 = vmatpush1.bf16.msra.mxu0 %v504
        %526 = vmatprep.subr.bf16.mxu0 0
        %527 = vmatpush1.bf16.msra.mxu0 %v505
        %528 = vmatprep.subr.bf16.mxu0 0
        %529 = vmatpush1.bf16.msra.mxu0 %v506
        %530 = vmatprep.subr.bf16.mxu0 0
        %531 = vmatpush1.bf16.msra.mxu0 %v507
        %532 = vmatprep.subr.bf16.mxu0 0
        %533 = vmatpush1.bf16.msra.mxu0 0
        %534 = vmatprep.subr.bf16.mxu0 0
        %535 = vmatpush1.bf16.msra.mxu0 0
        %536 = vmatprep.subr.bf16.mxu0 0
        %537 = vmatpush1.bf16.msra.mxu0 0
        %538 = vmatprep.subr.bf16.mxu0 0
        %539 = vmatpush1.bf16.msra.mxu0 0
        %540 = vmatprep.subr.bf16.mxu0 0
        %541 = vmatpush1.bf16.msra.mxu0 0
        %542 = vmatprep.subr.bf16.mxu0 0
        %543 = vmatpush1.bf16.msra.mxu0 0
        %544 = vmatprep.subr.bf16.mxu0 0
        %545 = vmatpush1.bf16.msra.mxu0 0
        %546 = vmatprep.subr.bf16.mxu0 0
        %547 = vmatpush1.bf16.msra.mxu0 0
        %548 = vmatprep.mubr.bf16.mxu0 0
        %549 = vmatmul.mubr.bf16.gmra.mrb[0].mxu0 %v444
        %v550 = vpop.f32.mrb[0].mxu0
        %v551 = vadd.f32 %v466, %v550
        %v552 = vpop.f32.mrb[0].mxu0
        %v553 = vpop.f32.mrb[0].mxu0
        %v554 = vpop.f32.mrb[0].mxu0
        %555 = vdwg.mxu0
        %v556 = vmax.f32 %v551, 0.0
        %v557 = vld [vmem:[#allocation3] sm:$0xff]
        %v558 = vpack.c.bf16 %v556, %v556
        %v559 = vld [vmem:[%s401] sm:$0xf]
        %v560 = vld [vmem:[%s401 + $0x4] sm:$0xf]
        %v561 = vld [vmem:[%s401 + $0x8] sm:$0xf]
        %v562 = vld [vmem:[%s401 + $0xc] sm:$0xf]
        %v563 = vld [vmem:[%s401 + $0x10] sm:$0xf]
        %v564 = vld [vmem:[%s401 + $0x14] sm:$0xf]
        %v565 = vld [vmem:[%s401 + $0x18] sm:$0xf]
        %v566 = vld [vmem:[%s401 + $0x1c] sm:$0xf]
        %v567 = vld [vmem:[%s401 + $0x20] sm:$0xf]
        %v568 = vld [vmem:[%s401 + $0x24] sm:$0xf]
        %v569 = vld [vmem:[%s401 + $0x28] sm:$0xf]
        %v570 = vld [vmem:[%s401 + $0x2c] sm:$0xf]
        %v571 = vld [vmem:[%s401 + $0x30] sm:$0xf]
        %v572 = vld [vmem:[%s401 + $0x34] sm:$0xf]
        %v573 = vld [vmem:[%s401 + $0x38] sm:$0xf]
        %v574 = vld [vmem:[%s401 + $0x3c] sm:$0xf]
        %v591 = vunpack.c.l.b16 %v559
        %v592 = vunpack.c.l.b16 %v560
        %v593 = vunpack.c.l.b16 %v561
        %v594 = vunpack.c.l.b16 %v562
        %v595 = vunpack.c.l.b16 %v563
        %v596 = vunpack.c.l.b16 %v564
        %v597 = vunpack.c.l.b16 %v565
        %v598 = vunpack.c.l.b16 %v566
        %v599 = vunpack.c.l.b16 %v567
        %v600 = vunpack.c.l.b16 %v568
        %v601 = vunpack.c.l.b16 %v569
        %v602 = vunpack.c.l.b16 %v570
        %v603 = vunpack.c.l.b16 %v571
        %v604 = vunpack.c.l.b16 %v572
        %v605 = vunpack.c.l.b16 %v573
        %v606 = vunpack.c.l.b16 %v574
        %v607 = vpack.c.b16 %v592, %v591
        %v608 = vpack.c.b16 %v594, %v593
        %v609 = vpack.c.b16 %v596, %v595
        %v610 = vpack.c.b16 %v598, %v597
        %v611 = vpack.c.b16 %v600, %v599
        %v612 = vpack.c.b16 %v602, %v601
        %v613 = vpack.c.b16 %v604, %v603
        %v614 = vpack.c.b16 %v606, %v605
        %623 = vmatprep.subr.bf16.mxu0 0
        %624 = vmatpush1.bf16.msra.mxu0 %v607
        %625 = vmatprep.subr.bf16.mxu0 0
        %626 = vmatpush1.bf16.msra.mxu0 %v608
        %627 = vmatprep.subr.bf16.mxu0 0
        %628 = vmatpush1.bf16.msra.mxu0 %v609
        %629 = vmatprep.subr.bf16.mxu0 0
        %630 = vmatpush1.bf16.msra.mxu0 %v610
        %631 = vmatprep.subr.bf16.mxu0 0
        %632 = vmatpush1.bf16.msra.mxu0 %v611
        %633 = vmatprep.subr.bf16.mxu0 0
        %634 = vmatpush1.bf16.msra.mxu0 %v612
        %635 = vmatprep.subr.bf16.mxu0 0
        %636 = vmatpush1.bf16.msra.mxu0 %v613
        %637 = vmatprep.subr.bf16.mxu0 0
        %638 = vmatpush1.bf16.msra.mxu0 %v614
        %639 = vmatprep.subr.bf16.mxu0 0
        %640 = vmatpush1.bf16.msra.mxu0 0
        %641 = vmatprep.subr.bf16.mxu0 0
        %642 = vmatpush1.bf16.msra.mxu0 0
        %643 = vmatprep.subr.bf16.mxu0 0
        %644 = vmatpush1.bf16.msra.mxu0 0
        %645 = vmatprep.subr.bf16.mxu0 0
        %646 = vmatpush1.bf16.msra.mxu0 0
        %647 = vmatprep.subr.bf16.mxu0 0
        %648 = vmatpush1.bf16.msra.mxu0 0
        %649 = vmatprep.subr.bf16.mxu0 0
        %650 = vmatpush1.bf16.msra.mxu0 0
        %651 = vmatprep.subr.bf16.mxu0 0
        %652 = vmatpush1.bf16.msra.mxu0 0
        %653 = vmatprep.subr.bf16.mxu0 0
        %654 = vmatpush1.bf16.msra.mxu0 0
        %655 = vmatprep.mubr.bf16.mxu0 0
        %656 = vmatmul.mubr.bf16.gmra.mrb[0].mxu0 %v558
        %v657 = vpop.f32.mrb[0].mxu0
        %v658 = vadd.f32 0.0, %v657
        %v659 = vpop.f32.mrb[0].mxu0
        %v660 = vpop.f32.mrb[0].mxu0
        %v661 = vpop.f32.mrb[0].mxu0
        %662 = vdwg.mxu0
        %v663 = vadd.f32 %v557, %v658
        %664 = vst [vmem:[#allocation3] sm:$0xff] %v663
        // Predicated region
        $region57: #{transformer_block.3} parent=51 // pred_check
          %p665 = pneg %p404
        $region58: #{transformer_block.3} parent=51 // pred_check_branch
          %667 = sbr.rel (%p665) target = $region60
        $region59: #{transformer_block.3} parent=51 // pred_region
          %v668 = vld [vmem:[#allocation3] sm:$0xff]
          %v669 = vld [vmem:[%s7] sm:$0x1]
          %v671 = vlaneseq
          %v672 = vshrl.u32 %v671, 7
          %v673 = vsub.s32 0, %v672
          %v674 = vrot.slane %v669, %v673
          %v676 = vadd.f32 %v668, %v674
          %v677 = vld [vmem:[#allocation2] sm:$0xff]
          %v678 = vadd.f32 %v676, %v677
          %v679 = vld [vmem:[%s2] sm:$0x1]
          %v680 = vld [vmem:[%s3] sm:$0x1]
          %681 = vadd.xlane.f32.xlu0 %v678
          %v682 = vpop.xlane.xlu0 %681
          %v683 = vmul.f32 %v678, %v678
          %684 = vadd.xlane.f32.xlu0 %v683
          %v685 = vpop.xlane.xlu0 %684
          %v686 = vrcp.pop 32.0
          %v687 = vmul.f32 %v682, %v686
          %v688 = vmul.f32 %v685, %v686
          %v689 = vmul.f32 %v687, %v687
          %v690 = vsub.f32 %v688, %v689
          %v691 = vsub.f32 %v678, %v687
          %v692 = vadd.f32 %v690, 1e-05
          %v693 = vrsqrt.pop %v692
          %v694 = vmul.f32 %v691, %v693
          %v696 = vlaneseq
          %v697 = vshrl.u32 %v696, 7
          %v698 = vsub.s32 0, %v697
          %v699 = vrot.slane %v679, %v698
          %v701 = vmul.f32 %v694, %v699
          %v703 = vlaneseq
          %v704 = vshrl.u32 %v703, 7
          %v705 = vsub.s32 0, %v704
          %v706 = vrot.slane %v680, %v705
          %v708 = vadd.f32 %v701, %v706
          %709 = vst [vmem:[%s378] sm:$0xff] %v708
        $region60: #{transformer_block.3} parent=51 // pred_fallthru
          _
        %s710 = sand.u32 %s246, 1
        %s711 = scalar_lea.sflag [#allocation5], %s710
        %s712 = sand.u32 %s246, 1
        %s713 = smul.addr %s712, 8
        %s714 = scalar_lea.vmem [#allocation4], %s713
        // Predicated region
        $region61: #{transformer_block.3} parent=51 // pred_check
          %p715 = pneg %p256
        $region62: #{transformer_block.3} parent=51 // pred_check_branch
          %717 = sbr.rel (%p715) target = $region64
        $region63: #{transformer_block.3} parent=51 // pred_region
          %s719 = ssub.s32 128, 128
          %720 = vsyncadd %s711, %s719
          %s721 = sadd.s32 %s28, %s27
          %s722 = smul.addr %s721, 128
          %s723 = scalar_lea.hbm %s8, %s722
          %s725 = sshll.u32 %s714, 4
          %s726 = int_to_ptr.vmem [resolvable:$true] %s725
          %728 = dma.vmem_to_hbm [thread:$0]  %s726, 128, %s723, %s711
        $region64: #{transformer_block.3} parent=51 // pred_fallthru
          _
      $region52: #{transformer_block.3} parent=5 // pred_fallthru
        _
      %p729 = scmp.le.s32.totalorder 2, %s17
      // Predicated region
      $region65: #{transformer_block.3} parent=5 // pred_check
        %p730 = pneg %p729
      $region66: #{transformer_block.3} parent=5 // pred_check_branch
        %732 = sbr.rel (%p730) target = $region68
      $region67: #{transformer_block.3} parent=5 // pred_region
        %s733 = ssub.s32 %s17, 2
        // Predicated region
        $region69: #{transformer_block.3} parent=67 // pred_check
          %p734 = pneg %p262
        $region70: #{transformer_block.3} parent=67 // pred_check_branch
          %736 = sbr.rel (%p734) target = $region72
        $region71: #{transformer_block.3} parent=67 // pred_region
          %s737 = sand.u32 %s247, 1
          %s738 = scalar_lea.sflag [#allocation5], %s737
          %s739 = sand.u32 %s247, 1
          %s740 = smul.addr %s739, 8
          %s741 = scalar_lea.vmem [#allocation4], %s740
          %742 = dma.done %s738, 128
        $region72: #{transformer_block.3} parent=67 // pred_fallthru
          _
      $region68: #{transformer_block.3} parent=5 // pred_fallthru
        _
    $region6: #{transformer_block.3} parent=1 // loop_footer
      %s21 = sadd.s32 1, %s17
    $region7: #{transformer_block.3} parent=1 // loop_footer_branch
      %16 = sbr.rel target = $region3
    $region8: #{transformer_block.3} parent=1 // loop_exit
      _
    %743 = vsyncpa [#allocation5], 1
    %s744 = scalar_lea.sflag [#allocation5], 1
    %745 = vsyncpa %s744, 1

</llo_original>
